<compile_context>
chip_gen: v7x
topology: tpu7x:2x2x1
jax: 0.10.0
libtpu: 0.0.40
codegen_flags: <defaults>
</compile_context>

<pallas_src>
import functools

import jax
import jax.numpy as jnp
from jax.experimental import pallas as pl
from jax.experimental.pallas import tpu as pltpu


def _inception_kernel(x_ref, w_ref, b_ref, o_ref, *, tb, half_l, threshold):
    """One batch-block of the fused inception forward.

    x_ref: (1, 2, C_in, (half_l+2)*tb)  bf16 even/odd-deinterleaved padded input,
           position-major within the block (column = t*tb + n_local).
    w_ref: (4*C_out, 6*C_in)            bf16 fused conv+pool weights.
    b_ref: (4*C_out, 1)                 f32 fused bias.
    o_ref: (1, 4*C_out, half_l*tb)      spikes (0/1).
    """
    cols = half_l * tb
    # im2col of the 6-tap stride-2 fused conv: tap u reads padded position 2j+u,
    # which after even/odd deinterleave is a unit-stride slice at offset (u//2)*tb.
    taps = []
    for u in range(6):
        off = (u // 2) * tb
        taps.append(x_ref[0, u % 2, :, off:off + cols])        # (C_in, cols)
    rhs = jnp.concatenate(taps, axis=0)                         # (6*C_in, cols)
    acc = jnp.dot(w_ref[...], rhs, preferred_element_type=jnp.float32)
    mem = acc + b_ref[...]                                      # fused bias (f32)
    # snn.Leaky single step with init_hidden=True (mem0 = 0): spike = mem > thr
    o_ref[0] = jnp.where(mem > threshold, 1.0, 0.0).astype(o_ref.dtype)


def _fuse_params(params):
    """Torch-layout conv weights -> one (4*C_out, 6*C_in) stride-2 fused weight.

    AvgPool1d(2) applied after a conv with taps w[0..4] (in pad-2 coordinates)
    equals a 6-tap stride-2 conv with taps 0.5*(w[u] + w[u-1]); branch_pool's
    3-tap average prefilter is absorbed as wp/3 on taps 1..3.
    """
    w1, b1 = params["w1"], params["b1"]
    w3, b3 = params["w3"], params["b3"]
    w5, b5 = params["w5"], params["b5"]
    wp, bp = params["wp"], params["bp"]
    c_out, c_in, _ = w1.shape

    w5tap = jnp.zeros((4, c_out, 5, c_in), jnp.float32)
    w5tap = w5tap.at[0, :, 2, :].set(w1[:, :, 0])
    w5tap = w5tap.at[1, :, 1:4, :].set(jnp.transpose(w3, (0, 2, 1)))
    w5tap = w5tap.at[2, :, :, :].set(jnp.transpose(w5, (0, 2, 1)))
    w5tap = w5tap.at[3, :, 1:4, :].set(
        jnp.transpose(jnp.repeat(wp, 3, axis=2), (0, 2, 1)) / 3.0)

    zero = jnp.zeros((4, c_out, 1, c_in), jnp.float32)
    w6 = 0.5 * (jnp.concatenate([w5tap, zero], axis=2)
                + jnp.concatenate([zero, w5tap], axis=2))       # (4, C_out, 6, C_in)
    w_fused = w6.reshape(4 * c_out, 6 * c_in)
    b_fused = jnp.concatenate([b1, b3, b5, bp]).astype(jnp.float32)
    return w_fused, b_fused.reshape(4 * c_out, 1)


def _pick_block_batch(n, half):
    """Samples per grid step: prefer >=2 grid steps (v7x has 2 TCs), lane-dense
    (multiple-of-128) blocks, then the largest block (amortize per-step overhead)."""
    best_d, best_key = n, (False, False, 0)
    for d in range(1, n + 1):
        if n % d:
            continue
        cols = d * half
        if cols > 16384:       # keep per-step VMEM footprint small (v7x: 64 MiB total)
            continue
        key = ((n // d) >= 2, cols % 128 == 0, cols)
        if key > best_key:
            best_d, best_key = d, key
    return best_d


def snn_inception_block(x, params, *, threshold=1.0, block_batch=None,
                        compute_dtype=jnp.bfloat16, out_dtype=jnp.bfloat16):
    """x: (N, C_in, L) f32. Returns spikes (N, 4*C_out, L//2), values exactly 0/1."""
    n, c_in, length = x.shape
    assert length % 2 == 0, "AvgPool1d(2) needs an even length"
    half = length // 2
    c_out = params["w1"].shape[0]

    w_fused, b_fused = _fuse_params(params)
    w_fused = w_fused.astype(compute_dtype)

    if block_batch is None:
        block_batch = _pick_block_batch(n, half)
    tb = block_batch
    assert n % tb == 0
    grid_n = n // tb

    # Pad 2 per side (covers k=1/3/5 and the branch-pool prefilter), deinterleave
    # even/odd positions, and lay each batch-block out position-major so the 6
    # stride-2 taps become unit-stride slices inside the kernel.
    x_pad = jnp.pad(x, ((0, 0), (0, 0), (2, 2)))                     # (N, C_in, L+4)
    xd = jnp.stack([x_pad[:, :, 0::2], x_pad[:, :, 1::2]], axis=1)    # (N, 2, C_in, half+2)
    xd = xd.reshape(grid_n, tb, 2, c_in, half + 2)
    xd = jnp.transpose(xd, (0, 2, 3, 4, 1))                           # (G, 2, C_in, half+2, TB)
    xd = xd.reshape(grid_n, 2, c_in, (half + 2) * tb).astype(compute_dtype)

    kernel = functools.partial(_inception_kernel, tb=tb, half_l=half,
                               threshold=float(threshold))

    out_flat = pl.pallas_call(
        kernel,
        out_shape=jax.ShapeDtypeStruct((grid_n, 4 * c_out, half * tb), out_dtype),
        grid_spec=pltpu.PrefetchScalarGridSpec(
            num_scalar_prefetch=0,
            grid=(grid_n,),
            in_specs=[
                pl.BlockSpec((1, 2, c_in, (half + 2) * tb), lambda g: (g, 0, 0, 0)),
                pl.BlockSpec((4 * c_out, 6 * c_in), lambda g: (0, 0)),
                pl.BlockSpec((4 * c_out, 1), lambda g: (0, 0)),
            ],
            out_specs=pl.BlockSpec((1, 4 * c_out, half * tb), lambda g: (g, 0, 0)),
        ),
        compiler_params=pltpu.CompilerParams(
            dimension_semantics=("parallel",)),
    )(xd, w_fused, b_fused)

    # Layout plumbing back to the module's (N, 4*C_out, L//2) NCL output.
    out = out_flat.reshape(grid_n, 4 * c_out, half, tb)
    out = jnp.transpose(out, (0, 3, 1, 2)).reshape(n, 4 * c_out, half)
    return out


# ---------------- parameter init (deterministic, PyTorch Conv1d layout) ----------------
def init_params(key, c_in, c_out):
    ks = jax.random.split(key, 8)

    def conv_init(kw, kb, k):
        bound = 1.0 / (c_in * k) ** 0.5
        w = jax.random.uniform(kw, (c_out, c_in, k), jnp.float32, -bound, bound)
        b = jax.random.uniform(kb, (c_out,), jnp.float32, -bound, bound)
        return w, b

    w1, b1 = conv_init(ks[0], ks[1], 1)
    w3, b3 = conv_init(ks[2], ks[3], 3)
    w5, b5 = conv_init(ks[4], ks[5], 5)
    wp, bp = conv_init(ks[6], ks[7], 1)
    return dict(w1=w1, b1=b1, w3=w3, b3=b3, w5=w5, b5=b5, wp=wp, bp=bp)


# ---------------- pure-JAX reference of the PyTorch forward ----------------
def reference_forward(x, p, threshold=1.0):
    def conv1d(x, w, b, pad):
        y = jax.lax.conv_general_dilated(
            x, w, window_strides=(1,), padding=[(pad, pad)],
            dimension_numbers=("NCH", "OIH", "NCH"))
        return y + b[None, :, None]

    def avgpool2(y):
        n, c, l = y.shape
        return y.reshape(n, c, l // 2, 2).mean(-1)

    n, c, l = x.shape
    xpad = jnp.pad(x, ((0, 0), (0, 0), (1, 1)))
    xpool = (xpad[:, :, 0:l] + xpad[:, :, 1:l + 1] + xpad[:, :, 2:l + 2]) / 3.0

    mems = [avgpool2(conv1d(x, p["w1"], p["b1"], 0)),
            avgpool2(conv1d(x, p["w3"], p["b3"], 1)),
            avgpool2(conv1d(x, p["w5"], p["b5"], 2)),
            avgpool2(conv1d(xpool, p["wp"], p["bp"], 0))]
    mem = jnp.concatenate(mems, axis=1)          # pre-threshold membrane
    spk = (mem > threshold).astype(jnp.float32)  # single-step Leaky (mem0 = 0)
    return spk, mem


if __name__ == "__main__":
    key = jax.random.PRNGKey(0)
    k_x, k_p = jax.random.split(key)

    N, C_in, L, C_out = 32, 4, 16, 8
    threshold = 1.0

    x = 2.0 * jax.random.normal(k_x, (N, C_in, L), jnp.float32)
    params = init_params(k_p, C_in, C_out)

    out = snn_inception_block(x, params, threshold=threshold)
    out = jax.block_until_ready(out)

    ref_spk, ref_mem = reference_forward(x, params, threshold=threshold)

    assert out.shape == (N, 4 * C_out, L // 2), out.shape
    out_f32 = out.astype(jnp.float32)
    # spikes must be exactly 0 / 1
    assert bool(jnp.all((out_f32 == 0.0) | (out_f32 == 1.0)))
    # bf16 inputs/weights can only flip a spike when the membrane lands within
    # rounding error of the threshold; require exact agreement everywhere else.
    decided = jnp.abs(ref_mem - threshold) > 0.15
    assert bool(jnp.all(jnp.where(decided, out_f32 == ref_spk, True))), \
        "spike mismatch vs pure-JAX reference away from the threshold boundary"

    print("KERNEL_OK")
</pallas_src>

<mosaic_0001>
module attributes {stable_mosaic.version = 11 : i64} {
  func.func @_inception_kernel(%arg0: i32, %arg1: memref<1x2x4x160xbf16, #tpu.memory_space<vmem>>, %arg2: memref<32x24xbf16, #tpu.memory_space<vmem>>, %arg3: memref<32x1xf32, #tpu.memory_space<vmem>>, %arg4: memref<1x32x128xbf16, #tpu.memory_space<vmem>>) attributes {dimension_semantics = [#tpu.dimension_semantics<parallel>], iteration_bounds = array<i64: 2>, scalar_prefetch = 0 : i64, scratch_operands = 0 : i64, tpu.core_type = #tpu.core_type<tc>, window_params = [{transform_indices = @transform_0, window_bounds = array<i64: 1, 2, 4, 160>}, {pipeline_mode = #tpu.pipeline_mode<synchronous>, transform_indices = @transform_1, window_bounds = array<i64: 32, 24>}, {pipeline_mode = #tpu.pipeline_mode<synchronous>, transform_indices = @transform_2, window_bounds = array<i64: 32, 1>}, {transform_indices = @transform_3, window_bounds = array<i64: 1, 32, 128>}]} {
    %c0 = arith.constant 0 : index
    %c0_0 = arith.constant 0 : index
    %c0_1 = arith.constant 0 : index
    %c0_2 = arith.constant 0 : index
    %0 = vector.load %arg1[%c0, %c0_0, %c0_1, %c0_2] : memref<1x2x4x160xbf16, #tpu.memory_space<vmem>>, vector<1x1x4x128xbf16>
    %1 = vector.shape_cast %0 : vector<1x1x4x128xbf16> to vector<4x128xbf16>
    %c0_3 = arith.constant 0 : index
    %c1 = arith.constant 1 : index
    %c0_4 = arith.constant 0 : index
    %c0_5 = arith.constant 0 : index
    %2 = vector.load %arg1[%c0_3, %c1, %c0_4, %c0_5] : memref<1x2x4x160xbf16, #tpu.memory_space<vmem>>, vector<1x1x4x128xbf16>
    %3 = vector.shape_cast %2 : vector<1x1x4x128xbf16> to vector<4x128xbf16>
    %c0_6 = arith.constant 0 : index
    %c0_7 = arith.constant 0 : index
    %c0_8 = arith.constant 0 : index
    %c16 = arith.constant 16 : index
    %4 = vector.load %arg1[%c0_6, %c0_7, %c0_8, %c16] : memref<1x2x4x160xbf16, #tpu.memory_space<vmem>>, vector<1x1x4x128xbf16>
    %5 = vector.shape_cast %4 : vector<1x1x4x128xbf16> to vector<4x128xbf16>
    %c0_9 = arith.constant 0 : index
    %c1_10 = arith.constant 1 : index
    %c0_11 = arith.constant 0 : index
    %c16_12 = arith.constant 16 : index
    %6 = vector.load %arg1[%c0_9, %c1_10, %c0_11, %c16_12] : memref<1x2x4x160xbf16, #tpu.memory_space<vmem>>, vector<1x1x4x128xbf16>
    %7 = vector.shape_cast %6 : vector<1x1x4x128xbf16> to vector<4x128xbf16>
    %c0_13 = arith.constant 0 : index
    %c0_14 = arith.constant 0 : index
    %c0_15 = arith.constant 0 : index
    %c32 = arith.constant 32 : index
    %8 = vector.load %arg1[%c0_13, %c0_14, %c0_15, %c32] : memref<1x2x4x160xbf16, #tpu.memory_space<vmem>>, vector<1x1x4x128xbf16>
    %9 = vector.shape_cast %8 : vector<1x1x4x128xbf16> to vector<4x128xbf16>
    %c0_16 = arith.constant 0 : index
    %c1_17 = arith.constant 1 : index
    %c0_18 = arith.constant 0 : index
    %c32_19 = arith.constant 32 : index
    %10 = vector.load %arg1[%c0_16, %c1_17, %c0_18, %c32_19] : memref<1x2x4x160xbf16, #tpu.memory_space<vmem>>, vector<1x1x4x128xbf16>
    %11 = vector.shape_cast %10 : vector<1x1x4x128xbf16> to vector<4x128xbf16>
    %12 = tpu.concatenate %1, %3, %5, %7, %9, %11 in 0 : vector<4x128xbf16>, vector<4x128xbf16>, vector<4x128xbf16>, vector<4x128xbf16>, vector<4x128xbf16>, vector<4x128xbf16> -> vector<24x128xbf16>
    %c0_20 = arith.constant 0 : index
    %c0_21 = arith.constant 0 : index
    %13 = vector.load %arg2[%c0_20, %c0_21] : memref<32x24xbf16, #tpu.memory_space<vmem>>, vector<32x24xbf16>
    %cst = arith.constant dense<0.000000e+00> : vector<32x128xf32>
    %14 = tpu.matmul %13, %12, %cst {dimension_numbers = #tpu.dot_dimension_numbers<[1], [0], [0], [1], [0, 0, 1, 1], [], []>} : vector<32x24xbf16>, vector<24x128xbf16>, vector<32x128xf32> -> vector<32x128xf32>
    %c0_22 = arith.constant 0 : index
    %c0_23 = arith.constant 0 : index
    %15 = vector.load %arg3[%c0_22, %c0_23] : memref<32x1xf32, #tpu.memory_space<vmem>>, vector<32x1xf32>
    %16 = vector.broadcast %15 : vector<32x1xf32> to vector<32x128xf32>
    %17 = arith.addf %14, %16 : vector<32x128xf32>
    %cst_24 = arith.constant 1.000000e+00 : f32
    %18 = vector.broadcast %cst_24 : f32 to vector<32x128xf32>
    %19 = arith.cmpf ogt, %17, %18 : vector<32x128xf32>
    %cst_25 = arith.constant 1.000000e+00 : f32
    %cst_26 = arith.constant 0.000000e+00 : f32
    %20 = vector.broadcast %cst_25 : f32 to vector<32x128xf32>
    %21 = vector.broadcast %cst_26 : f32 to vector<32x128xf32>
    %22 = arith.select %19, %20, %21 : vector<32x128xi1>, vector<32x128xf32>
    %23 = arith.truncf %22 : vector<32x128xf32> to vector<32x128xbf16>
    %c0_27 = arith.constant 0 : index
    %c0_28 = arith.constant 0 : index
    %c0_29 = arith.constant 0 : index
    %24 = vector.load %arg4[%c0_27, %c0_28, %c0_29] : memref<1x32x128xbf16, #tpu.memory_space<vmem>>, vector<1x32x128xbf16>
    %25 = vector.shape_cast %24 : vector<1x32x128xbf16> to vector<32x128xbf16>
    %26 = vector.shape_cast %23 : vector<32x128xbf16> to vector<1x32x128xbf16>
    tpu.vector_store %arg4[%c0_27, %c0_28, %c0_29], %26 {strides = array<i32>} : memref<1x32x128xbf16, #tpu.memory_space<vmem>>, vector<1x32x128xbf16>,
    return
  }
  func.func @transform_0(%arg0: i32) -> (i32, i32, i32, i32) {
    %c0_i32 = arith.constant 0 : i32
    %c0_i32_0 = arith.constant 0 : i32
    %c0_i32_1 = arith.constant 0 : i32
    %c0_i32_2 = arith.constant 0 : i32
    return %arg0, %c0_i32, %c0_i32_0, %c0_i32_1 : i32, i32, i32, i32
  }
  func.func @transform_1(%arg0: i32) -> (i32, i32) {
    %c0_i32 = arith.constant 0 : i32
    %c0_i32_0 = arith.constant 0 : i32
    %c0_i32_1 = arith.constant 0 : i32
    return %c0_i32, %c0_i32_0 : i32, i32
  }
  func.func @transform_2(%arg0: i32) -> (i32, i32) {
    %c0_i32 = arith.constant 0 : i32
    %c0_i32_0 = arith.constant 0 : i32
    %c0_i32_1 = arith.constant 0 : i32
    return %c0_i32, %c0_i32_0 : i32, i32
  }
  func.func @transform_3(%arg0: i32) -> (i32, i32, i32) {
    %c0_i32 = arith.constant 0 : i32
    %c0_i32_0 = arith.constant 0 : i32
    %c0_i32_1 = arith.constant 0 : i32
    return %arg0, %c0_i32, %c0_i32_0 : i32, i32, i32
  }
}

</mosaic_0001>

<llo_original>
// kernel: tpu_custom_call.1
$region0: #{tpu_custom_call.1}
  #allocation0 [shape = 'u32[]', space=smem, size = 0x4, offset = 0x4, fixed_abs, tag = 'smem constant byte address 0x4 - core index']
  #allocation1 [shape = 'u32[144,128]{1,0:T(1,128)}', space=vmem, size = 0x12000, scoped, tag = 'internal scratch']
  %s0 = inlined_call_operand.vmem [shape: bf16[2,2,4,160], index: 0, kind: input, shape index: {}]
  %s1 = inlined_call_operand.vmem [shape: bf16[32,24], index: 1, kind: input, shape index: {}]
  %s2 = inlined_call_operand.vmem [shape: f32[32,1], index: 2, kind: input, shape index: {}]
  %s3 = inlined_call_operand.hbm [shape: bf16[2,32,128], index: 3, kind: output, shape index: {}]
  %s4 = sld [smem:[#allocation0]]
  $region45: #{tpu_custom_call.1} parent=0
    _
  %s6 = ssub.s32 1, %s4
  %s7 = scalar_select 0, %s6, %s4
  $region1: #{tpu_custom_call.1} parent=0
    #allocation2 [shape = 'u8[16384]{0}', space=vmem, size = 0x4000, scoped, tag = 'output window, operand 0']
    #allocation3 [shape = 's32[2]{0}', space=sflag, size = 0x8, scoped, tag = 'scoped memory for tpu_custom_call.1']
    %8 = vsyncpa [#allocation3], 0
    %s9 = scalar_lea.sflag [#allocation3], 1
    %10 = vsyncpa %s9, 0
    loop: start=0, step=1, limit=4
    $region2: #{tpu_custom_call.1} parent=1 // loop_pre_header
      _
    $region3: #{tpu_custom_call.1} parent=1 // loop_header
      %s12 = sphi 0, %s16
      %p13 = scmp.ge.s32.totalorder %s12, 4
      %s22 = sphi 0, %s24
      %s25 = sphi 0, %s22
      %s26 = sphi 0, %s25
      %s42 = sphi 0, %s26
      %s46 = sphi 0, %s46
      %s48 = sphi 0, %s46
      %s49 = sphi 0, %s48
      %s63 = sphi 0, %s49
      %s67 = sphi 0, %s67
      %s69 = sphi 0, %s67
      %s70 = sphi 0, %s69
      %s84 = sphi 0, %s70
      %s90 = sphi 0, %s92
      %s93 = sphi 0, %s90
      %s94 = sphi 0, %s93
      %s110 = sphi 0, %s94
    $region4: #{tpu_custom_call.1} parent=1 // loop_header_branch
      %15 = sbr.rel (%p13) target = $region8
    $region5: #{tpu_custom_call.1} parent=1 // loop_body
      %s17 = ssub.s32 %s12, 1
      %s18 = ssub.s32 %s12, 2
      %s19 = sadd.s32 %s12, 1
      %s20 = ssub.s32 %s12, %s19
      %p21 = scmp.eq.s32.totalorder %s20, 0
      %s23 = sadd.s32 %s22, 1
      %s24 = scalar_select %p21, %s22, %s23
      %p27 = pneg %p21
      %p28 = scmp.eq.s32.totalorder %s12, 1
      %p29 = por %p27, %p28
      %p30 = scmp.ne.s32.totalorder %s22, %s25
      %p31 = scmp.eq.s32.totalorder %s12, 0
      %p32 = por %p30, %p31
      %p33 = scmp.ne.s32.totalorder %s22, %s25
      %p34 = scmp.eq.s32.totalorder %s17, 1
      %p35 = por %p33, %p34
      %p36 = scmp.ne.s32.totalorder %s25, %s26
      %p37 = scmp.eq.s32.totalorder %s17, 0
      %p38 = por %p36, %p37
      %p39 = scmp.ne.s32.totalorder %s25, %s26
      %p40 = scmp.eq.s32.totalorder %s18, 1
      %p41 = por %p39, %p40
      %p43 = scmp.ne.s32.totalorder %s26, %s42
      %p44 = scmp.eq.s32.totalorder %s18, 0
      %p45 = por %p43, %p44
      %s47 = sadd.s32 %s46, 1
      %p50 = scmp.eq.s32.totalorder %s12, 1
      %p51 = scmp.ne.s32.totalorder %s46, %s48
      %p52 = scmp.eq.s32.totalorder %s12, 0
      %p53 = por %p51, %p52
      %p54 = scmp.ne.s32.totalorder %s46, %s48
      %p55 = scmp.eq.s32.totalorder %s17, 1
      %p56 = por %p54, %p55
      %p57 = scmp.ne.s32.totalorder %s48, %s49
      %p58 = scmp.eq.s32.totalorder %s17, 0
      %p59 = por %p57, %p58
      %p60 = scmp.ne.s32.totalorder %s48, %s49
      %p61 = scmp.eq.s32.totalorder %s18, 1
      %p62 = por %p60, %p61
      %p64 = scmp.ne.s32.totalorder %s49, %s63
      %p65 = scmp.eq.s32.totalorder %s18, 0
      %p66 = por %p64, %p65
      %s68 = sadd.s32 %s67, 1
      %p71 = scmp.eq.s32.totalorder %s12, 1
      %p72 = scmp.ne.s32.totalorder %s67, %s69
      %p73 = scmp.eq.s32.totalorder %s12, 0
      %p74 = por %p72, %p73
      %p75 = scmp.ne.s32.totalorder %s67, %s69
      %p76 = scmp.eq.s32.totalorder %s17, 1
      %p77 = por %p75, %p76
      %p78 = scmp.ne.s32.totalorder %s69, %s70
      %p79 = scmp.eq.s32.totalorder %s17, 0
      %p80 = por %p78, %p79
      %p81 = scmp.ne.s32.totalorder %s69, %s70
      %p82 = scmp.eq.s32.totalorder %s18, 1
      %p83 = por %p81, %p82
      %p85 = scmp.ne.s32.totalorder %s70, %s84
      %p86 = scmp.eq.s32.totalorder %s18, 0
      %p87 = por %p85, %p86
      %s88 = ssub.s32 %s12, %s19
      %p89 = scmp.eq.s32.totalorder %s88, 0
      %s91 = sadd.s32 %s90, 1
      %s92 = scalar_select %p89, %s90, %s91
      %p95 = pneg %p89
      %p96 = scmp.eq.s32.totalorder %s12, 1
      %p97 = por %p95, %p96
      %p98 = scmp.ne.s32.totalorder %s90, %s93
      %p99 = scmp.eq.s32.totalorder %s12, 0
      %p100 = por %p98, %p99
      %p101 = scmp.ne.s32.totalorder %s90, %s93
      %p102 = scmp.eq.s32.totalorder %s17, 1
      %p103 = por %p101, %p102
      %p104 = scmp.ne.s32.totalorder %s93, %s94
      %p105 = scmp.eq.s32.totalorder %s17, 0
      %p106 = por %p104, %p105
      %p107 = scmp.ne.s32.totalorder %s93, %s94
      %p108 = scmp.eq.s32.totalorder %s18, 1
      %p109 = por %p107, %p108
      %p111 = scmp.ne.s32.totalorder %s94, %s110
      %p112 = scmp.eq.s32.totalorder %s18, 0
      %p113 = por %p111, %p112
      %p114 = scmp.le.s32.totalorder 1, %s12
      %p115 = scmp.lt.s32.totalorder %s12, 3
      %p116 = pnand %p114, %p115
      %p117 = pneg %p116
      // Predicated region
      $region9: #{tpu_custom_call.1} parent=5 // pred_check
        _
      $region10: #{tpu_custom_call.1} parent=5 // pred_check_branch
        %119 = sbr.rel (%p116) target = $region12
      $region11: #{tpu_custom_call.1} parent=5 // pred_region
        %s120 = ssub.s32 %s12, 1
        // Predicated region
        $region13: #{tpu_custom_call.1} parent=11 // pred_check
          %p121 = pneg %p59
        $region14: #{tpu_custom_call.1} parent=11 // pred_check_branch
          %123 = sbr.rel (%p121) target = $region16
        $region15: #{tpu_custom_call.1} parent=11 // pred_region
          _
        $region16: #{tpu_custom_call.1} parent=11 // pred_fallthru
          _
        // Predicated region
        $region17: #{tpu_custom_call.1} parent=11 // pred_check
          %p124 = pneg %p80
        $region18: #{tpu_custom_call.1} parent=11 // pred_check_branch
          %126 = sbr.rel (%p124) target = $region20
        $region19: #{tpu_custom_call.1} parent=11 // pred_region
          _
        $region20: #{tpu_custom_call.1} parent=11 // pred_fallthru
          _
      $region12: #{tpu_custom_call.1} parent=5 // pred_fallthru
        _
      %p127 = scmp.lt.s32.totalorder %s12, 2
      // Predicated region
      $region21: #{tpu_custom_call.1} parent=5 // pred_check
        %p128 = pneg %p127
      $region22: #{tpu_custom_call.1} parent=5 // pred_check_branch
        %130 = sbr.rel (%p128) target = $region24
      $region23: #{tpu_custom_call.1} parent=5 // pred_region
        // Predicated region
        $region25: #{tpu_custom_call.1} parent=23 // pred_check
          %p131 = pneg %p32
        $region26: #{tpu_custom_call.1} parent=23 // pred_check_branch
          %133 = sbr.rel (%p131) target = $region28
        $region27: #{tpu_custom_call.1} parent=23 // pred_region
          %p134 = scmp.lt.s32.totalorder %s12, 1
          %s135 = scalar_select %p134, %s12, 1
          %s136 = smul.addr %s135, 4
          %s137 = smul.addr %s136, 2
          %s138 = scalar_lea.vmem %s0, %s137
        $region28: #{tpu_custom_call.1} parent=23 // pred_fallthru
          _
      $region24: #{tpu_custom_call.1} parent=5 // pred_fallthru
        _
      %p139 = scmp.le.s32.totalorder 1, %s12
      %p140 = scmp.lt.s32.totalorder %s12, 3
      %p141 = pnand %p139, %p140
      %p142 = pneg %p141
      // Predicated region
      $region29: #{tpu_custom_call.1} parent=5 // pred_check
        _
      $region30: #{tpu_custom_call.1} parent=5 // pred_check_branch
        %144 = sbr.rel (%p141) target = $region32
      $region31: #{tpu_custom_call.1} parent=5 // pred_region
        %s145 = ssub.s32 %s12, 1
        %p146 = scmp.lt.s32.totalorder %s17, 1
        %s147 = scalar_select %p146, %s17, 1
        %s148 = smul.addr %s147, 4
        %s149 = smul.addr %s148, 2
        %s150 = scalar_lea.vmem %s0, %s149
        %p151 = pneg %p38
        %p152 = pneg %p35
        %p153 = pneg %p59
        %p154 = pneg %p56
        %p155 = pneg %p80
        %p156 = pneg %p77
        %p157 = pneg %p106
        %p158 = pneg %p103
        %s159 = sand.u32 %s93, 1
        %s160 = scalar_lea.sflag [#allocation3], %s159
        %s161 = sand.u32 %s93, 1
        %s162 = smul.addr %s161, 16
        %s163 = scalar_lea.vmem [#allocation2], %s162
        %p164 = scmp.lt.s32.totalorder %s17, 1
        %s165 = scalar_select %p164, %s17, 1
        %s166 = smul.addr %s165, 4
        %s167 = smul.addr %s166, 2
        %s168 = scalar_lea.vmem %s0, %s167
        %v170 = vld [vmem:[%s168] sm:$0x3]
        %s171 = scalar_lea.vmem %s168, 4
        %v172 = vld [vmem:[%s171] sm:$0x3]
        %v173 = vld [vmem:[%s168] sm:$0xf]
        %v174 = vld [vmem:[%s171] sm:$0xf]
        %v176 = vcombine.low %v172, %v172
        %v178 = vunpack.c.l.s4 1983009808
        %v179 = vunpack.c.0.s8 %v178
        %v180 = vlaneseq
        %v181 = vshrl.u32 %v180, 7
        %v182 = vsub.s32 %v179, %v181
        %v183 = vrot.slane %v176, %v182
        %v186 = vunpack.c.l.s4 1983009808
        %v187 = vunpack.c.0.s8 %v186
        %v188 = vlaneseq
        %v189 = vshrl.u32 %v188, 7
        %v190 = vsub.s32 %v187, %v189
        %v191 = vrot.slane %v173, %v190
        %v192 = vcombine.low %v191, %v191
        %193 = vrot.lane.b32.xlu0 %v192, 112
        %v194 = vpop.permute.xlu0 %193
        %195 = vrot.lane.b32.xlu0 %v191, 112
        %v196 = vpop.permute.xlu0 %195
        %vm197 = vcmask 916480
        %v198 = vsel %vm197, %v194, %v196
        %v200 = vcombine.low %v174, %v174
        %v202 = vunpack.c.l.s4 1983009808
        %v203 = vunpack.c.0.s8 %v202
        %v204 = vlaneseq
        %v205 = vshrl.u32 %v204, 7
        %v206 = vsub.s32 %v203, %v205
        %v207 = vrot.slane %v200, %v206
        %v208 = vcombine.low %v207, %v207
        %209 = vrot.lane.b32.xlu0 %v208, 112
        %v210 = vpop.permute.xlu0 %209
        %211 = vrot.lane.b32.xlu0 %v207, 112
        %v212 = vpop.permute.xlu0 %211
        %v213 = vsel %vm197, %v210, %v212
        %v214 = vcombine.high %v191, %v191
        %215 = vrot.lane.b32.xlu0 %v191, 96
        %v216 = vpop.permute.xlu0 %215
        %217 = vrot.lane.b32.xlu0 %v214, 96
        %v218 = vpop.permute.xlu0 %217
        %vm219 = vcmask 785408
        %v220 = vsel %vm219, %v216, %v218
        %v221 = vcombine.high %v207, %v207
        %222 = vrot.lane.b32.xlu0 %v207, 96
        %v223 = vpop.permute.xlu0 %222
        %224 = vrot.lane.b32.xlu0 %v221, 96
        %v225 = vpop.permute.xlu0 %224
        %v226 = vsel %vm219, %v223, %v225
        %vm227 = vcmask 1041408
        %v230 = vsel %vm227, %v170, %v183
        %vm231 = vcmask 1043456
        %v233 = vsel %vm231, %v230, %v198
        %vm234 = vcmask 1045504
        %v236 = vsel %vm234, %v233, %v213
        %v240 = vsel %vm227, %v220, %v226
        %v241 = vld [vmem:[%s1] sm:$0xf]
        %v242 = vld [vmem:[%s1 + $0x4] sm:$0xf]
        %v243 = vld [vmem:[%s1 + $0x8] sm:$0xf]
        %v244 = vld [vmem:[%s1 + $0xc] sm:$0xf]
        %v245 = vld [vmem:[%s2] sm:$0xff]
        %v246 = vld [vmem:[%s2 + $0x8] sm:$0xff]
        %v247 = vld [vmem:[%s2 + $0x10] sm:$0xff]
        %v248 = vld [vmem:[%s2 + $0x18] sm:$0xff]
        %250 = vset.pattern.permute.xlu0 0
        %251 = vperm.xlu0 %250, %v245
        %v252 = vpop.permute.xlu0 %251
        %255 = vset.pattern.permute.xlu0 0
        %256 = vperm.xlu0 %255, %v246
        %v257 = vpop.permute.xlu0 %256
        %260 = vset.pattern.permute.xlu0 0
        %261 = vperm.xlu0 %260, %v247
        %v262 = vpop.permute.xlu0 %261
        %265 = vset.pattern.permute.xlu0 0
        %266 = vperm.xlu0 %265, %v248
        %v267 = vpop.permute.xlu0 %266
        %v273 = vunpack.c.l.b16 %v241
        %v274 = vunpack.c.l.b16 %v242
        %v275 = vunpack.c.l.b16 %v243
        %v276 = vunpack.c.l.b16 %v244
        %v277 = vpack.c.b16 %v274, %v273
        %v278 = vpack.c.b16 %v276, %v275
        %vm279 = vcmask 195584
        %v281 = vsel %vm279, %v277, 0
        %v284 = vsel %vm279, %v278, 0
        %v286 = vsel %vm231, %v240, 0
        %288 = vmatprep.subr.bf16.mxu0 0
        %289 = vmatpush1.bf16.msra.mxu0 %v236
        %290 = vmatprep.subr.bf16.mxu0 0
        %291 = vmatpush1.bf16.msra.mxu0 %v286
        %292 = vmatprep.subr.bf16.mxu0 0
        %293 = vmatpush1.bf16.msra.mxu0 0
        %294 = vmatprep.subr.bf16.mxu0 0
        %295 = vmatpush1.bf16.msra.mxu0 0
        %296 = vmatprep.subr.bf16.mxu0 0
        %297 = vmatpush1.bf16.msra.mxu0 0
        %298 = vmatprep.subr.bf16.mxu0 0
        %299 = vmatpush1.bf16.msra.mxu0 0
        %300 = vmatprep.subr.bf16.mxu0 0
        %301 = vmatpush1.bf16.msra.mxu0 0
        %302 = vmatprep.subr.bf16.mxu0 0
        %303 = vmatpush1.bf16.msra.mxu0 0
        %304 = vmatprep.subr.bf16.mxu0 0
        %305 = vmatpush1.bf16.msra.mxu0 0
        %306 = vmatprep.subr.bf16.mxu0 0
        %307 = vmatpush1.bf16.msra.mxu0 0
        %308 = vmatprep.subr.bf16.mxu0 0
        %309 = vmatpush1.bf16.msra.mxu0 0
        %310 = vmatprep.subr.bf16.mxu0 0
        %311 = vmatpush1.bf16.msra.mxu0 0
        %312 = vmatprep.subr.bf16.mxu0 0
        %313 = vmatpush1.bf16.msra.mxu0 0
        %314 = vmatprep.subr.bf16.mxu0 0
        %315 = vmatpush1.bf16.msra.mxu0 0
        %316 = vmatprep.subr.bf16.mxu0 0
        %317 = vmatpush1.bf16.msra.mxu0 0
        %318 = vmatprep.subr.bf16.mxu0 0
        %319 = vmatpush1.bf16.msra.mxu0 0
        %320 = vmatprep.mubr.bf16.mxu0 0
        %321 = vmatmul.mubr.bf16.gmra.mrb[0].mxu0 %v281
        %v322 = vpop.f32.mrb[0].mxu0
        %v323 = vadd.f32 %v252, %v322
        %v324 = vpop.f32.mrb[0].mxu0
        %v325 = vpop.f32.mrb[0].mxu0
        %v326 = vadd.f32 %v257, %v325
        %v327 = vpop.f32.mrb[0].mxu0
        %328 = vmatprep.mubr.bf16.mxu0 0
        %329 = vmatmul.mubr.bf16.gmra.mrb[0].mxu0 %v284
        %v330 = vpop.f32.mrb[0].mxu0
        %v331 = vadd.f32 %v262, %v330
        %v332 = vpop.f32.mrb[0].mxu0
        %v333 = vpop.f32.mrb[0].mxu0
        %v334 = vadd.f32 %v267, %v333
        %v335 = vpop.f32.mrb[0].mxu0
        %336 = vdwg.mxu0
        %vm337 = vcmp.gt.f32.partialorder %v323, 1.0
        %vm338 = vcmp.gt.f32.partialorder %v326, 1.0
        %vm339 = vcmp.gt.f32.partialorder %v331, 1.0
        %vm340 = vcmp.gt.f32.partialorder %v334, 1.0
        %v341 = vsel %vm337, 1.0, 0.0
        %v342 = vsel %vm338, 1.0, 0.0
        %v343 = vsel %vm339, 1.0, 0.0
        %v344 = vsel %vm340, 1.0, 0.0
        %v345 = vpack.c.bf16 %v342, %v341
        %v346 = vpack.c.bf16 %v344, %v343
        %v349 = vunpack.c.l.b16 %v345
        %v350 = vunpack.c.h.b16 %v345
        %v351 = vunpack.c.l.b16 %v346
        %v352 = vunpack.c.h.b16 %v346
        %v353 = vpack.c.b16 %v349, %v349
        %v354 = vpack.c.b16 %v350, %v350
        %v355 = vpack.c.b16 %v351, %v351
        %v356 = vpack.c.b16 %v352, %v352
        %361 = vst [vmem:[%s163] sm:$0xf] %v353
        %362 = vst [vmem:[%s163 + $0x4] sm:$0xf] %v354
        %363 = vst [vmem:[%s163 + $0x8] sm:$0xf] %v355
        %364 = vst [vmem:[%s163 + $0xc] sm:$0xf] %v356
        %s365 = sand.u32 %s93, 1
        %s366 = scalar_lea.sflag [#allocation3], %s365
        %s367 = sand.u32 %s93, 1
        %s368 = smul.addr %s367, 16
        %s369 = scalar_lea.vmem [#allocation2], %s368
        // Predicated region
        $region33: #{tpu_custom_call.1} parent=31 // pred_check
          %p370 = pneg %p103
        $region34: #{tpu_custom_call.1} parent=31 // pred_check_branch
          %372 = sbr.rel (%p370) target = $region36
        $region35: #{tpu_custom_call.1} parent=31 // pred_region
          %s374 = ssub.s32 256, 256
          %375 = vsyncadd %s366, %s374
          %s376 = smul.addr %s17, 4
          %s377 = smul.addr %s376, 64
          %s378 = scalar_lea.hbm %s3, %s377
          %s379 = sshll.u32 %s369, 4
          %s380 = int_to_ptr.vmem [resolvable:$true] %s379
          %385 = dma.vmem_to_hbm [thread:$0]  %s380, 256, %s378, %s366, 64, 64, 4
        $region36: #{tpu_custom_call.1} parent=31 // pred_fallthru
          _
      $region32: #{tpu_custom_call.1} parent=5 // pred_fallthru
        _
      %p386 = scmp.le.s32.totalorder 2, %s12
      // Predicated region
      $region37: #{tpu_custom_call.1} parent=5 // pred_check
        %p387 = pneg %p386
      $region38: #{tpu_custom_call.1} parent=5 // pred_check_branch
        %389 = sbr.rel (%p387) target = $region40
      $region39: #{tpu_custom_call.1} parent=5 // pred_region
        %s390 = ssub.s32 %s12, 2
        // Predicated region
        $region41: #{tpu_custom_call.1} parent=39 // pred_check
          %p391 = pneg %p109
        $region42: #{tpu_custom_call.1} parent=39 // pred_check_branch
          %393 = sbr.rel (%p391) target = $region44
        $region43: #{tpu_custom_call.1} parent=39 // pred_region
          %s394 = sand.u32 %s94, 1
          %s395 = scalar_lea.sflag [#allocation3], %s394
          %s396 = sand.u32 %s94, 1
          %s397 = smul.addr %s396, 16
          %s398 = scalar_lea.vmem [#allocation2], %s397
          %399 = dma.done %s395, 256
        $region44: #{tpu_custom_call.1} parent=39 // pred_fallthru
          _
      $region40: #{tpu_custom_call.1} parent=5 // pred_fallthru
        _
    $region6: #{tpu_custom_call.1} parent=1 // loop_footer
      %s16 = sadd.s32 1, %s12
    $region7: #{tpu_custom_call.1} parent=1 // loop_footer_branch
      %11 = sbr.rel target = $region3
    $region8: #{tpu_custom_call.1} parent=1 // loop_exit
      _
    %400 = vsyncpa [#allocation3], 1
    %s401 = scalar_lea.sflag [#allocation3], 1
    %402 = vsyncpa %s401, 1

</llo_original>
